<compile_context>
chip_gen: v5e
topology: v5e:2x2
jax: 0.10.0
libtpu: 0.0.40
codegen_flags: <defaults>
</compile_context>

<pallas_src>
import jax
import jax.numpy as jnp
from jax.experimental import pallas as pl
from jax.experimental.pallas import tpu as pltpu


GROUP = 16  # batch rows packed per 128-lane row (16 * 8 features = 128 lanes)

# Packed parameter slab layout (f32, shape (264, 64)):
#   rows   0:128  W1b = kron(I16, W1.T)  (128, 64)
#   rows 128:192  W2b = kron(I16, W2.T)  ( 64, 64)
#   rows 192:256  W3b = kron(I16, W3.T)  ( 64, 32)   (cols 0:32)
#   row  256      b1 tiled 16x           (64,)
#   row  257      b2 tiled 16x           (64,)
#   row  258      b3 tiled 16x           (32,)        (cols 0:32)


def mlp_kernel(xp_ref, p_ref, op_ref):
    # xp_ref: (tr, 128) -- 16 batch rows per 128-lane row.  All f32.
    x = xp_ref[...]

    w1 = p_ref[0:128, :]            # (128, 64) block-diagonal
    w2 = p_ref[128:192, :]          # (64, 64)
    w3 = p_ref[192:256, 0:32]       # (64, 32)
    b1 = p_ref[256:257, :]          # (1, 64), broadcasts over rows
    b2 = p_ref[257:258, :]          # (1, 64)
    b3 = p_ref[258:259, 0:32]       # (1, 32)

    h1 = jnp.dot(x, w1, preferred_element_type=jnp.float32) + b1    # (tr, 64)
    h1 = jnp.maximum(h1, 0.0)
    h2 = jnp.dot(h1, w2, preferred_element_type=jnp.float32) + b2   # (tr, 64)
    h2 = jnp.maximum(h2, 0.0)
    out = jnp.dot(h2, w3, preferred_element_type=jnp.float32) + b3  # (tr, 32)
    op_ref[...] = out.astype(op_ref.dtype)


def pack_params(params):
    """Pack (w1,b1,w2,b2,w3,b3) into one (264, 64) f32 slab of block-diag weights."""
    w1, b1, w2, b2, w3, b3 = params
    eye = jnp.eye(GROUP, dtype=jnp.float32)
    w1b = jnp.kron(eye, w1.T.astype(jnp.float32))   # (128, 64)
    w2b = jnp.kron(eye, w2.T.astype(jnp.float32))   # (64, 64)
    w3b = jnp.kron(eye, w3.T.astype(jnp.float32))   # (64, 32)
    slab = jnp.zeros((264, 64), jnp.float32)
    slab = slab.at[0:128, 0:64].set(w1b)
    slab = slab.at[128:192, 0:64].set(w2b)
    slab = slab.at[192:256, 0:32].set(w3b)
    slab = slab.at[256, 0:64].set(jnp.tile(b1.astype(jnp.float32), GROUP))
    slab = slab.at[257, 0:64].set(jnp.tile(b2.astype(jnp.float32), GROUP))
    slab = slab.at[258, 0:32].set(jnp.tile(b3.astype(jnp.float32), GROUP))
    return slab


def _choose_tiles(num_rows, max_rows_per_tile):
    """Pick (rows_per_tile, n_tiles) for the packed (rows, 128) input."""
    if num_rows <= 8:
        return max(num_rows, 1), 1
    # >= 2 tiles so the "parallel" grid axis can feed both TensorCores on v7x;
    # cap the tile so double-buffered VMEM stays well inside every generation's
    # default scoped limit (2048 rows * 128 lanes * 4 B = 1 MiB per buffer).
    n_tiles = max(2, pl.cdiv(num_rows, max_rows_per_tile))
    rows_per_tile = pl.cdiv(num_rows, n_tiles)
    rows_per_tile = ((rows_per_tile + 7) // 8) * 8     # sublane-align (8,128) rule
    n_tiles = pl.cdiv(num_rows, rows_per_tile)
    return rows_per_tile, n_tiles


def simple_mlp_forward(x, params, *, max_rows_per_tile=2048):
    """x: (B, 8) f32.  Returns (B, 2) f32, matching SimpleMLP.forward."""
    B, in_dim = x.shape
    assert in_dim == 8
    slab = pack_params(params)

    # Pack 16 batch rows into one 128-lane row.  For row-major x this reshape is
    # a free bitcast -- no extra HBM pass (unlike the old transpose + pad).
    rows = pl.cdiv(B, GROUP)
    tr, n_tiles = _choose_tiles(rows, max_rows_per_tile)
    rows_p = tr * n_tiles
    Bp = rows_p * GROUP
    if Bp != B:
        # Only the ragged-B case costs an extra pad pass; padded rows are
        # computed on zeros and sliced off below.
        x = jnp.pad(x, ((0, Bp - B), (0, 0)))
    xp = x.reshape(rows_p, GROUP * 8)                  # (rows_p, 128), free

    outp = pl.pallas_call(
        mlp_kernel,
        out_shape=jax.ShapeDtypeStruct((rows_p, 32), jnp.float32),
        grid=(n_tiles,),
        in_specs=[
            pl.BlockSpec((tr, 128), lambda i: (i, 0)),   # streamed batch tiles
            pl.BlockSpec((264, 64), lambda i: (0, 0)),   # params: VMEM-resident
        ],
        out_specs=pl.BlockSpec((tr, 32), lambda i: (i, 0)),
        compiler_params=pltpu.CompilerParams(
            dimension_semantics=("parallel",),           # both TCs on v7x
        ),
    )(xp, slab)

    # (rows_p, 32) -> (Bp, 2) is another free bitcast reshape of contiguous rows.
    return outp.reshape(Bp, 2)[:B]


def init_params(key):
    """Deterministic init matching nn.Linear shapes: W (out, in), b (out,)."""
    dims = [(8, 4), (4, 4), (4, 2)]
    params = []
    for d_in, d_out in dims:
        key, kw, kb = jax.random.split(key, 3)
        bound = 1.0 / jnp.sqrt(d_in)
        w = jax.random.uniform(kw, (d_out, d_in), jnp.float32, -bound, bound)
        b = jax.random.uniform(kb, (d_out,), jnp.float32, -bound, bound)
        params.extend([w, b])
    return tuple(params)


def reference_forward(x, params):
    w1, b1, w2, b2, w3, b3 = params
    h1 = jnp.maximum(x @ w1.T + b1, 0.0)
    h2 = jnp.maximum(h1 @ w2.T + b2, 0.0)
    return h2 @ w3.T + b3


if __name__ == "__main__":
    key = jax.random.PRNGKey(0)
    kx, kp = jax.random.split(key)
    B = 2048  # packs to 128 rows -> 2 tiles of 64 rows (exercises the parallel grid)
    x = jax.random.normal(kx, (B, 8), jnp.float32)
    params = init_params(kp)

    out = jax.block_until_ready(simple_mlp_forward(x, params))
    ref = reference_forward(x, params)

    assert out.shape == (B, 2), out.shape
    max_err = float(jnp.max(jnp.abs(out - ref)))
    # Everything stays f32 now -> tight tolerance.
    assert jnp.allclose(out, ref, atol=1e-3, rtol=1e-3), f"mismatch vs reference: {max_err}"
    print("KERNEL_OK")
</pallas_src>

<mosaic_0001>
module attributes {stable_mosaic.version = 11 : i64} {
  func.func @mlp_kernel(%arg0: i32, %arg1: memref<64x128xf32, #tpu.memory_space<vmem>>, %arg2: memref<264x64xf32, #tpu.memory_space<vmem>>, %arg3: memref<64x32xf32, #tpu.memory_space<vmem>>) attributes {dimension_semantics = [#tpu.dimension_semantics<parallel>], iteration_bounds = array<i64: 2>, scalar_prefetch = 0 : i64, scratch_operands = 0 : i64, tpu.core_type = #tpu.core_type<tc>, window_params = [{transform_indices = @transform_0, window_bounds = array<i64: 64, 128>}, {pipeline_mode = #tpu.pipeline_mode<synchronous>, transform_indices = @transform_1, window_bounds = array<i64: 264, 64>}, {transform_indices = @transform_2, window_bounds = array<i64: 64, 32>}]} {
    %c0 = arith.constant 0 : index
    %c0_0 = arith.constant 0 : index
    %0 = vector.load %arg1[%c0, %c0_0] : memref<64x128xf32, #tpu.memory_space<vmem>>, vector<64x128xf32>
    %c0_1 = arith.constant 0 : index
    %c0_2 = arith.constant 0 : index
    %1 = vector.load %arg2[%c0_1, %c0_2] : memref<264x64xf32, #tpu.memory_space<vmem>>, vector<128x64xf32>
    %c128 = arith.constant 128 : index
    %c0_3 = arith.constant 0 : index
    %2 = vector.load %arg2[%c128, %c0_3] : memref<264x64xf32, #tpu.memory_space<vmem>>, vector<64x64xf32>
    %c192 = arith.constant 192 : index
    %c0_4 = arith.constant 0 : index
    %3 = vector.load %arg2[%c192, %c0_4] : memref<264x64xf32, #tpu.memory_space<vmem>>, vector<64x32xf32>
    %c256 = arith.constant 256 : index
    %c0_5 = arith.constant 0 : index
    %4 = vector.load %arg2[%c256, %c0_5] : memref<264x64xf32, #tpu.memory_space<vmem>>, vector<1x64xf32>
    %c257 = arith.constant 257 : index
    %c0_6 = arith.constant 0 : index
    %5 = vector.load %arg2[%c257, %c0_6] : memref<264x64xf32, #tpu.memory_space<vmem>>, vector<1x64xf32>
    %c258 = arith.constant 258 : index
    %c0_7 = arith.constant 0 : index
    %6 = vector.load %arg2[%c258, %c0_7] : memref<264x64xf32, #tpu.memory_space<vmem>>, vector<1x32xf32>
    %cst = arith.constant dense<0.000000e+00> : vector<64x64xf32>
    %7 = tpu.matmul %0, %1, %cst {dimension_numbers = #tpu.dot_dimension_numbers<[1], [0], [0], [1], [0, 0, 1, 1], [], []>} : vector<64x128xf32>, vector<128x64xf32>, vector<64x64xf32> -> vector<64x64xf32>
    %8 = vector.broadcast %4 : vector<1x64xf32> to vector<64x64xf32>
    %9 = arith.addf %7, %8 : vector<64x64xf32>
    %cst_8 = arith.constant 0.000000e+00 : f32
    %10 = vector.broadcast %cst_8 : f32 to vector<64x64xf32>
    %11 = arith.maximumf %9, %10 : vector<64x64xf32>
    %cst_9 = arith.constant dense<0.000000e+00> : vector<64x64xf32>
    %12 = tpu.matmul %11, %2, %cst_9 {dimension_numbers = #tpu.dot_dimension_numbers<[1], [0], [0], [1], [0, 0, 1, 1], [], []>} : vector<64x64xf32>, vector<64x64xf32>, vector<64x64xf32> -> vector<64x64xf32>
    %13 = vector.broadcast %5 : vector<1x64xf32> to vector<64x64xf32>
    %14 = arith.addf %12, %13 : vector<64x64xf32>
    %cst_10 = arith.constant 0.000000e+00 : f32
    %15 = vector.broadcast %cst_10 : f32 to vector<64x64xf32>
    %16 = arith.maximumf %14, %15 : vector<64x64xf32>
    %cst_11 = arith.constant dense<0.000000e+00> : vector<64x32xf32>
    %17 = tpu.matmul %16, %3, %cst_11 {dimension_numbers = #tpu.dot_dimension_numbers<[1], [0], [0], [1], [0, 0, 1, 1], [], []>} : vector<64x64xf32>, vector<64x32xf32>, vector<64x32xf32> -> vector<64x32xf32>
    %18 = vector.broadcast %6 : vector<1x32xf32> to vector<64x32xf32>
    %19 = arith.addf %17, %18 : vector<64x32xf32>
    %c0_12 = arith.constant 0 : index
    %c0_13 = arith.constant 0 : index
    %20 = vector.load %arg3[%c0_12, %c0_13] : memref<64x32xf32, #tpu.memory_space<vmem>>, vector<64x32xf32>
    tpu.vector_store %arg3[%c0_12, %c0_13], %19 {strides = array<i32>} : memref<64x32xf32, #tpu.memory_space<vmem>>, vector<64x32xf32>,
    return
  }
  func.func @transform_0(%arg0: i32) -> (i32, i32) {
    %c0_i32 = arith.constant 0 : i32
    %c0_i32_0 = arith.constant 0 : i32
    return %arg0, %c0_i32 : i32, i32
  }
  func.func @transform_1(%arg0: i32) -> (i32, i32) {
    %c0_i32 = arith.constant 0 : i32
    %c0_i32_0 = arith.constant 0 : i32
    %c0_i32_1 = arith.constant 0 : i32
    return %c0_i32, %c0_i32_0 : i32, i32
  }
  func.func @transform_2(%arg0: i32) -> (i32, i32) {
    %c0_i32 = arith.constant 0 : i32
    %c0_i32_0 = arith.constant 0 : i32
    return %arg0, %c0_i32 : i32, i32
  }
}

</mosaic_0001>

<llo_original>
// kernel: tpu_custom_call.1
$region0: #{tpu_custom_call.1}
  #allocation0 [shape = 'u32[]', space=smem, size = 0x4, offset = 0x4, fixed_abs, tag = 'smem constant byte address 0x4 - core index']
  #allocation1 [shape = 'u32[72,128]{1,0:T(1,128)}', space=vmem, size = 0x9000, scoped, tag = 'internal scratch']
  %s0 = inlined_call_operand.vmem [shape: f32[128,128], index: 0, kind: input, shape index: {}]
  %s1 = inlined_call_operand.vmem [shape: f32[264,64], index: 1, kind: input, shape index: {}]
  %s2 = inlined_call_operand.vmem [shape: f32[128,32], index: 2, kind: output, shape index: {}]
  %s3 = sld [smem:[#allocation0]]
  $region41: #{tpu_custom_call.1} parent=0
    _
  %s5 = ssub.s32 1, %s3
  %s6 = scalar_select 0, %s5, %s3
  loop: start=0, step=1, limit=4
  $region2: #{tpu_custom_call.1} parent=0 // loop_pre_header
    _
  $region3: #{tpu_custom_call.1} parent=0 // loop_header
    %s8 = sphi 0, %s12
    %p9 = scmp.ge.s32.totalorder %s8, 4
    %s18 = sphi 0, %s20
    %s21 = sphi 0, %s18
    %s22 = sphi 0, %s21
    %s38 = sphi 0, %s22
    %s42 = sphi 0, %s42
    %s44 = sphi 0, %s42
    %s45 = sphi 0, %s44
    %s59 = sphi 0, %s45
    %s65 = sphi 0, %s67
    %s68 = sphi 0, %s65
    %s69 = sphi 0, %s68
    %s85 = sphi 0, %s69
  $region4: #{tpu_custom_call.1} parent=0 // loop_header_branch
    %11 = sbr.rel (%p9) target = $region8
  $region5: #{tpu_custom_call.1} parent=0 // loop_body
    %s13 = ssub.s32 %s8, 1
    %s14 = ssub.s32 %s8, 2
    %s15 = sadd.s32 %s8, 1
    %s16 = ssub.s32 %s8, %s15
    %p17 = scmp.eq.s32.totalorder %s16, 0
    %s19 = sadd.s32 %s18, 1
    %s20 = scalar_select %p17, %s18, %s19
    %p23 = pneg %p17
    %p24 = scmp.eq.s32.totalorder %s8, 1
    %p25 = por %p23, %p24
    %p26 = scmp.ne.s32.totalorder %s18, %s21
    %p27 = scmp.eq.s32.totalorder %s8, 0
    %p28 = por %p26, %p27
    %p29 = scmp.ne.s32.totalorder %s18, %s21
    %p30 = scmp.eq.s32.totalorder %s13, 1
    %p31 = por %p29, %p30
    %p32 = scmp.ne.s32.totalorder %s21, %s22
    %p33 = scmp.eq.s32.totalorder %s13, 0
    %p34 = por %p32, %p33
    %p35 = scmp.ne.s32.totalorder %s21, %s22
    %p36 = scmp.eq.s32.totalorder %s14, 1
    %p37 = por %p35, %p36
    %p39 = scmp.ne.s32.totalorder %s22, %s38
    %p40 = scmp.eq.s32.totalorder %s14, 0
    %p41 = por %p39, %p40
    %s43 = sadd.s32 %s42, 1
    %p46 = scmp.eq.s32.totalorder %s8, 1
    %p47 = scmp.ne.s32.totalorder %s42, %s44
    %p48 = scmp.eq.s32.totalorder %s8, 0
    %p49 = por %p47, %p48
    %p50 = scmp.ne.s32.totalorder %s42, %s44
    %p51 = scmp.eq.s32.totalorder %s13, 1
    %p52 = por %p50, %p51
    %p53 = scmp.ne.s32.totalorder %s44, %s45
    %p54 = scmp.eq.s32.totalorder %s13, 0
    %p55 = por %p53, %p54
    %p56 = scmp.ne.s32.totalorder %s44, %s45
    %p57 = scmp.eq.s32.totalorder %s14, 1
    %p58 = por %p56, %p57
    %p60 = scmp.ne.s32.totalorder %s45, %s59
    %p61 = scmp.eq.s32.totalorder %s14, 0
    %p62 = por %p60, %p61
    %s63 = ssub.s32 %s8, %s15
    %p64 = scmp.eq.s32.totalorder %s63, 0
    %s66 = sadd.s32 %s65, 1
    %s67 = scalar_select %p64, %s65, %s66
    %p70 = pneg %p64
    %p71 = scmp.eq.s32.totalorder %s8, 1
    %p72 = por %p70, %p71
    %p73 = scmp.ne.s32.totalorder %s65, %s68
    %p74 = scmp.eq.s32.totalorder %s8, 0
    %p75 = por %p73, %p74
    %p76 = scmp.ne.s32.totalorder %s65, %s68
    %p77 = scmp.eq.s32.totalorder %s13, 1
    %p78 = por %p76, %p77
    %p79 = scmp.ne.s32.totalorder %s68, %s69
    %p80 = scmp.eq.s32.totalorder %s13, 0
    %p81 = por %p79, %p80
    %p82 = scmp.ne.s32.totalorder %s68, %s69
    %p83 = scmp.eq.s32.totalorder %s14, 1
    %p84 = por %p82, %p83
    %p86 = scmp.ne.s32.totalorder %s69, %s85
    %p87 = scmp.eq.s32.totalorder %s14, 0
    %p88 = por %p86, %p87
    %p89 = scmp.le.s32.totalorder 1, %s8
    %p90 = scmp.lt.s32.totalorder %s8, 3
    %p91 = pnand %p89, %p90
    %p92 = pneg %p91
    // Predicated region
    $region9: #{tpu_custom_call.1} parent=5 // pred_check
      _
    $region10: #{tpu_custom_call.1} parent=5 // pred_check_branch
      %94 = sbr.rel (%p91) target = $region12
    $region11: #{tpu_custom_call.1} parent=5 // pred_region
      %s95 = ssub.s32 %s8, 1
      // Predicated region
      $region13: #{tpu_custom_call.1} parent=11 // pred_check
        %p96 = pneg %p55
      $region14: #{tpu_custom_call.1} parent=11 // pred_check_branch
        %98 = sbr.rel (%p96) target = $region16
      $region15: #{tpu_custom_call.1} parent=11 // pred_region
        _
      $region16: #{tpu_custom_call.1} parent=11 // pred_fallthru
        _
    $region12: #{tpu_custom_call.1} parent=5 // pred_fallthru
      _
    %p99 = scmp.lt.s32.totalorder %s8, 2
    // Predicated region
    $region17: #{tpu_custom_call.1} parent=5 // pred_check
      %p100 = pneg %p99
    $region18: #{tpu_custom_call.1} parent=5 // pred_check_branch
      %102 = sbr.rel (%p100) target = $region20
    $region19: #{tpu_custom_call.1} parent=5 // pred_region
      // Predicated region
      $region21: #{tpu_custom_call.1} parent=19 // pred_check
        %p103 = pneg %p28
      $region22: #{tpu_custom_call.1} parent=19 // pred_check_branch
        %105 = sbr.rel (%p103) target = $region24
      $region23: #{tpu_custom_call.1} parent=19 // pred_region
        %s106 = smul.u32 8, %s8
        %p107 = scmp.lt.s32.totalorder %s106, 15
        %s108 = scalar_select %p107, %s106, 15
        %s109 = smul.addr %s108, 8
        %s110 = scalar_lea.vmem %s0, %s109
        %s111 = smul.u32 8, %s8
      $region24: #{tpu_custom_call.1} parent=19 // pred_fallthru
        _
    $region20: #{tpu_custom_call.1} parent=5 // pred_fallthru
      _
    %p112 = scmp.le.s32.totalorder 1, %s8
    %p113 = scmp.lt.s32.totalorder %s8, 3
    %p114 = pnand %p112, %p113
    %p115 = pneg %p114
    // Predicated region
    $region25: #{tpu_custom_call.1} parent=5 // pred_check
      _
    $region26: #{tpu_custom_call.1} parent=5 // pred_check_branch
      %117 = sbr.rel (%p114) target = $region28
    $region27: #{tpu_custom_call.1} parent=5 // pred_region
      %s118 = ssub.s32 %s8, 1
      %s119 = smul.u32 8, %s13
      %p120 = scmp.lt.s32.totalorder %s119, 15
      %s121 = scalar_select %p120, %s119, 15
      %s122 = smul.addr %s121, 8
      %s123 = scalar_lea.vmem %s0, %s122
      %p124 = pneg %p34
      %p125 = pneg %p31
      %p126 = pneg %p55
      %p127 = pneg %p52
      %p128 = pneg %p81
      %p129 = pneg %p78
      %s130 = smul.u32 8, %s13
      %p131 = scmp.lt.s32.totalorder %s130, 15
      %s132 = scalar_select %p131, %s130, 15
      %s133 = smul.addr %s132, 8
      %s134 = scalar_lea.vmem %s2, %s133
      %s135 = smul.u32 8, %s13
      %p136 = scmp.lt.s32.totalorder %s135, 15
      %s137 = scalar_select %p136, %s135, 15
      %s138 = smul.addr %s137, 8
      %s139 = scalar_lea.vmem %s0, %s138
      %s140 = smul.u32 8, %s13
      %s141 = smul.u32 8, %s13
      %p142 = scmp.lt.s32.totalorder %s141, 15
      %s143 = scalar_select %p142, %s141, 15
      %s144 = smul.addr %s143, 8
      %s145 = scalar_lea.vmem %s2, %s144
      %s146 = smul.u32 8, %s13
      %v147 = vld [vmem:[%s139] sm:$0xff]
      %v148 = vld [vmem:[%s139 + $0x8] sm:$0xff]
      %v149 = vld [vmem:[%s139 + $0x10] sm:$0xff]
      %v150 = vld [vmem:[%s139 + $0x18] sm:$0xff]
      %v151 = vld [vmem:[%s139 + $0x20] sm:$0xff]
      %v152 = vld [vmem:[%s139 + $0x28] sm:$0xff]
      %v153 = vld [vmem:[%s139 + $0x30] sm:$0xff]
      %v154 = vld [vmem:[%s139 + $0x38] sm:$0xff]
      %v155 = vld [vmem:[%s1] sm:$0xff]
      %v156 = vld [vmem:[%s1 + $0x8] sm:$0xff]
      %v157 = vld [vmem:[%s1 + $0x10] sm:$0xff]
      %v158 = vld [vmem:[%s1 + $0x18] sm:$0xff]
      %v159 = vld [vmem:[%s1 + $0x20] sm:$0xff]
      %v160 = vld [vmem:[%s1 + $0x28] sm:$0xff]
      %v161 = vld [vmem:[%s1 + $0x30] sm:$0xff]
      %v162 = vld [vmem:[%s1 + $0x38] sm:$0xff]
      %v163 = vld [vmem:[%s1 + $0x40] sm:$0xff]
      %v164 = vld [vmem:[%s1 + $0x48] sm:$0xff]
      %v165 = vld [vmem:[%s1 + $0x50] sm:$0xff]
      %v166 = vld [vmem:[%s1 + $0x58] sm:$0xff]
      %v167 = vld [vmem:[%s1 + $0x60] sm:$0xff]
      %v168 = vld [vmem:[%s1 + $0x68] sm:$0xff]
      %v169 = vld [vmem:[%s1 + $0x70] sm:$0xff]
      %v170 = vld [vmem:[%s1 + $0x78] sm:$0xff]
      %v171 = vld [vmem:[%s1 + $0x80] sm:$0xff]
      %v172 = vld [vmem:[%s1 + $0x88] sm:$0xff]
      %v173 = vld [vmem:[%s1 + $0x90] sm:$0xff]
      %v174 = vld [vmem:[%s1 + $0x98] sm:$0xff]
      %v175 = vld [vmem:[%s1 + $0xa0] sm:$0xff]
      %v176 = vld [vmem:[%s1 + $0xa8] sm:$0xff]
      %v177 = vld [vmem:[%s1 + $0xb0] sm:$0xff]
      %v178 = vld [vmem:[%s1 + $0xb8] sm:$0xff]
      %v179 = vld [vmem:[%s1 + $0xc0] sm:$0xff]
      %v180 = vld [vmem:[%s1 + $0xc8] sm:$0xff]
      %v181 = vld [vmem:[%s1 + $0xd0] sm:$0xff]
      %v182 = vld [vmem:[%s1 + $0xd8] sm:$0xff]
      %v183 = vld [vmem:[%s1 + $0xe0] sm:$0xff]
      %v184 = vld [vmem:[%s1 + $0xe8] sm:$0xff]
      %v185 = vld [vmem:[%s1 + $0xf0] sm:$0xff]
      %v186 = vld [vmem:[%s1 + $0xf8] sm:$0xff]
      %v187 = vld [vmem:[%s1 + $0x100] sm:$0x1]
      %v188 = vld [vmem:[%s1 + $0x101] sm:$0x1]
      %v189 = vld [vmem:[%s1 + $0x102] sm:$0x1]
      %v190 = vperm.slane %v187, 0
      %191 = vmatpush.msra.mxu0 %v170
      %192 = vmatpush.msra.mxu0 %v169
      %193 = vmatpush.msra.mxu0 %v168
      %194 = vmatpush.msra.mxu0 %v167
      %195 = vmatpush.msra.mxu0 %v166
      %196 = vmatpush.msra.mxu0 %v165
      %197 = vmatpush.msra.mxu0 %v164
      %198 = vmatpush.msra.mxu0 %v163
      %199 = vmatpush.msra.mxu0 %v162
      %200 = vmatpush.msra.mxu0 %v161
      %201 = vmatpush.msra.mxu0 %v160
      %202 = vmatpush.msra.mxu0 %v159
      %203 = vmatpush.msra.mxu0 %v158
      %204 = vmatpush.msra.mxu0 %v157
      %205 = vmatpush.msra.mxu0 %v156
      %206 = vmatpush.msra.mxu0 %v155
      %207 = vmatmul.f32.gmra.mxu0 %v147
      %v208 = vpop.f32.mrf.mxu0
      %v209 = vadd.f32 %v190, %v208
      %210 = vmatmul.f32.gmra.mxu0 %v148
      %v211 = vpop.f32.mrf.mxu0
      %v212 = vadd.f32 %v190, %v211
      %213 = vmatmul.f32.gmra.mxu0 %v149
      %v214 = vpop.f32.mrf.mxu0
      %v215 = vadd.f32 %v190, %v214
      %216 = vmatmul.f32.gmra.mxu0 %v150
      %v217 = vpop.f32.mrf.mxu0
      %v218 = vadd.f32 %v190, %v217
      %219 = vmatmul.f32.gmra.mxu0 %v151
      %v220 = vpop.f32.mrf.mxu0
      %v221 = vadd.f32 %v190, %v220
      %222 = vmatmul.f32.gmra.mxu0 %v152
      %v223 = vpop.f32.mrf.mxu0
      %v224 = vadd.f32 %v190, %v223
      %225 = vmatmul.f32.gmra.mxu0 %v153
      %v226 = vpop.f32.mrf.mxu0
      %v227 = vadd.f32 %v190, %v226
      %228 = vmatmul.f32.gmra.mxu0 %v154
      %v229 = vpop.f32.mrf.mxu0
      %v230 = vadd.f32 %v190, %v229
      %231 = vdwg.mxu0
      %v232 = vmax.f32 %v209, 0.0
      %v233 = vmax.f32 %v212, 0.0
      %v234 = vmax.f32 %v215, 0.0
      %v235 = vmax.f32 %v218, 0.0
      %v236 = vmax.f32 %v221, 0.0
      %v237 = vmax.f32 %v224, 0.0
      %v238 = vmax.f32 %v227, 0.0
      %v239 = vmax.f32 %v230, 0.0
      %v240 = vperm.slane %v188, 0
      %vm241 = vcmask 523264
      %v243 = vsel %vm241, %v232, 0
      %v246 = vsel %vm241, %v233, 0
      %v249 = vsel %vm241, %v234, 0
      %v252 = vsel %vm241, %v235, 0
      %v255 = vsel %vm241, %v236, 0
      %v258 = vsel %vm241, %v237, 0
      %v261 = vsel %vm241, %v238, 0
      %v264 = vsel %vm241, %v239, 0
      %266 = vmatpush.msra.mxu0 0.0
      %267 = vmatpush.msra.mxu0 0.0
      %268 = vmatpush.msra.mxu0 0.0
      %269 = vmatpush.msra.mxu0 0.0
      %270 = vmatpush.msra.mxu0 0.0
      %271 = vmatpush.msra.mxu0 0.0
      %272 = vmatpush.msra.mxu0 0.0
      %273 = vmatpush.msra.mxu0 0.0
      %274 = vmatpush.msra.mxu0 %v178
      %275 = vmatpush.msra.mxu0 %v177
      %276 = vmatpush.msra.mxu0 %v176
      %277 = vmatpush.msra.mxu0 %v175
      %278 = vmatpush.msra.mxu0 %v174
      %279 = vmatpush.msra.mxu0 %v173
      %280 = vmatpush.msra.mxu0 %v172
      %281 = vmatpush.msra.mxu0 %v171
      %282 = vmatmul.f32.gmra.mxu0 %v243
      %v283 = vpop.f32.mrf.mxu0
      %v284 = vadd.f32 %v240, %v283
      %285 = vmatmul.f32.gmra.mxu0 %v246
      %v286 = vpop.f32.mrf.mxu0
      %v287 = vadd.f32 %v240, %v286
      %288 = vmatmul.f32.gmra.mxu0 %v249
      %v289 = vpop.f32.mrf.mxu0
      %v290 = vadd.f32 %v240, %v289
      %291 = vmatmul.f32.gmra.mxu0 %v252
      %v292 = vpop.f32.mrf.mxu0
      %v293 = vadd.f32 %v240, %v292
      %294 = vmatmul.f32.gmra.mxu0 %v255
      %v295 = vpop.f32.mrf.mxu0
      %v296 = vadd.f32 %v240, %v295
      %297 = vmatmul.f32.gmra.mxu0 %v258
      %v298 = vpop.f32.mrf.mxu0
      %v299 = vadd.f32 %v240, %v298
      %300 = vmatmul.f32.gmra.mxu0 %v261
      %v301 = vpop.f32.mrf.mxu0
      %v302 = vadd.f32 %v240, %v301
      %303 = vmatmul.f32.gmra.mxu0 %v264
      %v304 = vpop.f32.mrf.mxu0
      %v305 = vadd.f32 %v240, %v304
      %306 = vdwg.mxu0
      %v307 = vmax.f32 %v284, 0.0
      %v308 = vmax.f32 %v287, 0.0
      %v309 = vmax.f32 %v290, 0.0
      %v310 = vmax.f32 %v293, 0.0
      %v311 = vmax.f32 %v296, 0.0
      %v312 = vmax.f32 %v299, 0.0
      %v313 = vmax.f32 %v302, 0.0
      %v314 = vmax.f32 %v305, 0.0
      %v315 = vperm.slane %v189, 0
      %v317 = vsel %vm241, %v307, 0
      %v320 = vsel %vm241, %v308, 0
      %v323 = vsel %vm241, %v309, 0
      %v326 = vsel %vm241, %v310, 0
      %v329 = vsel %vm241, %v311, 0
      %v332 = vsel %vm241, %v312, 0
      %v335 = vsel %vm241, %v313, 0
      %v338 = vsel %vm241, %v314, 0
      %340 = vmatpush.msra.mxu0 0.0
      %341 = vmatpush.msra.mxu0 0.0
      %342 = vmatpush.msra.mxu0 0.0
      %343 = vmatpush.msra.mxu0 0.0
      %344 = vmatpush.msra.mxu0 0.0
      %345 = vmatpush.msra.mxu0 0.0
      %346 = vmatpush.msra.mxu0 0.0
      %347 = vmatpush.msra.mxu0 0.0
      %348 = vmatpush.msra.mxu0 %v186
      %349 = vmatpush.msra.mxu0 %v185
      %350 = vmatpush.msra.mxu0 %v184
      %351 = vmatpush.msra.mxu0 %v183
      %352 = vmatpush.msra.mxu0 %v182
      %353 = vmatpush.msra.mxu0 %v181
      %354 = vmatpush.msra.mxu0 %v180
      %355 = vmatpush.msra.mxu0 %v179
      %356 = vmatmul.f32.gmra.mxu0 %v317
      %v357 = vpop.f32.mrf.mxu0
      %v358 = vadd.f32 %v315, %v357
      %359 = vmatmul.f32.gmra.mxu0 %v320
      %v360 = vpop.f32.mrf.mxu0
      %v361 = vadd.f32 %v315, %v360
      %362 = vmatmul.f32.gmra.mxu0 %v323
      %v363 = vpop.f32.mrf.mxu0
      %v364 = vadd.f32 %v315, %v363
      %365 = vmatmul.f32.gmra.mxu0 %v326
      %v366 = vpop.f32.mrf.mxu0
      %v367 = vadd.f32 %v315, %v366
      %368 = vmatmul.f32.gmra.mxu0 %v329
      %v369 = vpop.f32.mrf.mxu0
      %v370 = vadd.f32 %v315, %v369
      %371 = vmatmul.f32.gmra.mxu0 %v332
      %v372 = vpop.f32.mrf.mxu0
      %v373 = vadd.f32 %v315, %v372
      %374 = vmatmul.f32.gmra.mxu0 %v335
      %v375 = vpop.f32.mrf.mxu0
      %v376 = vadd.f32 %v315, %v375
      %377 = vmatmul.f32.gmra.mxu0 %v338
      %v378 = vpop.f32.mrf.mxu0
      %v379 = vadd.f32 %v315, %v378
      %380 = vdwg.mxu0
      %vm381 = vcmask 261120
      %382 = vst.msk [vmem:[%s145] sm:$0xff] %vm381, %v358
      %383 = vst.msk [vmem:[%s145 + $0x8] sm:$0xff] %vm381, %v361
      %384 = vst.msk [vmem:[%s145 + $0x10] sm:$0xff] %vm381, %v364
      %385 = vst.msk [vmem:[%s145 + $0x18] sm:$0xff] %vm381, %v367
      %386 = vst.msk [vmem:[%s145 + $0x20] sm:$0xff] %vm381, %v370
      %387 = vst.msk [vmem:[%s145 + $0x28] sm:$0xff] %vm381, %v373
      %388 = vst.msk [vmem:[%s145 + $0x30] sm:$0xff] %vm381, %v376
      %389 = vst.msk [vmem:[%s145 + $0x38] sm:$0xff] %vm381, %v379
      %s390 = smul.u32 8, %s13
      %p391 = scmp.lt.s32.totalorder %s390, 15
      %s392 = scalar_select %p391, %s390, 15
      %s393 = smul.addr %s392, 8
      %s394 = scalar_lea.vmem %s2, %s393
      // Predicated region
      $region29: #{tpu_custom_call.1} parent=27 // pred_check
        %p395 = pneg %p78
      $region30: #{tpu_custom_call.1} parent=27 // pred_check_branch
        %397 = sbr.rel (%p395) target = $region32
      $region31: #{tpu_custom_call.1} parent=27 // pred_region
        %s398 = smul.u32 8, %s13
      $region32: #{tpu_custom_call.1} parent=27 // pred_fallthru
        _
    $region28: #{tpu_custom_call.1} parent=5 // pred_fallthru
      _
    %p399 = scmp.le.s32.totalorder 2, %s8
    // Predicated region
    $region33: #{tpu_custom_call.1} parent=5 // pred_check
      %p400 = pneg %p399
    $region34: #{tpu_custom_call.1} parent=5 // pred_check_branch
      %402 = sbr.rel (%p400) target = $region36
    $region35: #{tpu_custom_call.1} parent=5 // pred_region
      %s403 = ssub.s32 %s8, 2
      // Predicated region
      $region37: #{tpu_custom_call.1} parent=35 // pred_check
        %p404 = pneg %p84
      $region38: #{tpu_custom_call.1} parent=35 // pred_check_branch
        %406 = sbr.rel (%p404) target = $region40
      $region39: #{tpu_custom_call.1} parent=35 // pred_region
        %s407 = smul.u32 8, %s14
        %p408 = scmp.lt.s32.totalorder %s407, 15
        %s409 = scalar_select %p408, %s407, 15
        %s410 = smul.addr %s409, 8
        %s411 = scalar_lea.vmem %s2, %s410
      $region40: #{tpu_custom_call.1} parent=35 // pred_fallthru
        _
    $region36: #{tpu_custom_call.1} parent=5 // pred_fallthru
      _
  $region6: #{tpu_custom_call.1} parent=0 // loop_footer
    %s12 = sadd.s32 1, %s8
  $region7: #{tpu_custom_call.1} parent=0 // loop_footer_branch
    %7 = sbr.rel target = $region3
  $region8: #{tpu_custom_call.1} parent=0 // loop_exit
    _

</llo_original>
